<compile_context>
chip_gen: v5e
topology: v5e:2x2
jax: 0.10.0
libtpu: 0.0.40
codegen_flags: <defaults>
</compile_context>

<pallas_src>
import functools

import jax
import jax.numpy as jnp
from jax import lax
from jax.experimental import pallas as pl
from jax.experimental.pallas import tpu as pltpu


def _lstm_regressor_kernel(Hp, Tblk,
                           x_ref, w_ih_ref, w_hh_ref, b_ref,
                           w_out_ref, b_out_ref,
                           out_ref, xproj_sc, hs_sc):
    """Whole (padded) sequence + params resident in VMEM; serial recurrence.

    Gate layout: [i, f, o, g] along the 4*Hp axis (reordered from PyTorch's
    [i, f, g, o] in the wrapper), each gate padded from H to Hp lanes.
    Padded lanes stay exactly zero throughout the recurrence.
    """
    Tp = x_ref.shape[0]
    nblk = Tp // Tblk

    # ---- hoisted input projection: one bf16 matmul, f32 accumulation ----
    xproj_sc[...] = (jnp.dot(x_ref[...], w_ih_ref[...],
                             preferred_element_type=jnp.float32)
                     + b_ref[...])                       # (Tp, 4*Hp) f32

    # zero-initialized (h0, c0), like PyTorch nn.LSTM with no initial state
    h0 = jnp.zeros((1, Hp), jnp.float32)
    c0 = jnp.zeros((1, Hp), jnp.float32)

    def block_step(blk, carry):
        h, c = carry
        t0 = pl.multiple_of(blk * Tblk, Tblk)
        w_hh = w_hh_ref[...]                 # (Hp, 4*Hp) bf16, reused by the block
        rows = []
        for r in range(Tblk):                # inner unroll-by-Tblk
            # gates = X_proj[t] + h_{t-1} @ W_hh   (bf16 MXU, f32 accumulate)
            gates = (xproj_sc[pl.ds(t0 + r, 1), :]
                     + jnp.dot(h.astype(jnp.bfloat16), w_hh,
                               preferred_element_type=jnp.float32))
            # [i, f, o] via one contiguous tanh-form sigmoid; g via tanh
            sig = 0.5 * jnp.tanh(0.5 * gates[:, 0:3 * Hp]) + 0.5
            i_g = sig[:, 0:Hp]
            f_g = sig[:, Hp:2 * Hp]
            o_g = sig[:, 2 * Hp:3 * Hp]
            g_g = jnp.tanh(gates[:, 3 * Hp:4 * Hp])
            c = f_g * c + i_g * g_g
            h = o_g * jnp.tanh(c)
            rows.append(h)
        # one aligned (Tblk, Hp) store per block instead of Tblk masked stores
        hs_sc[pl.ds(t0, Tblk), :] = jnp.concatenate(rows, axis=0)
        return (h, c)

    lax.fori_loop(0, nblk, block_step, (h0, c0))

    # ---- hoisted output Linear(hidden, 1): lane-dense (1, Tp) result ----
    out_row = lax.dot_general(w_out_ref[...], hs_sc[...],
                              (((1,), (1,)), ((), ())),   # contract hidden dims
                              preferred_element_type=jnp.float32)
    out_ref[...] = (out_row + b_out_ref[0]).astype(out_ref.dtype)


def lstm_regressor_forward(x, params, *, hidden_dim, reduce=False, block_t=8):
    """x: (T, input_dim) float32  ->  (T,) float32."""
    T, _ = x.shape
    H = hidden_dim
    Hp = ((H + 127) // 128) * 128             # per-gate lane padding (vreg-aligned)
    Tp = ((T + block_t - 1) // block_t) * block_t

    # ---- host-side param prep --------------------------------------------
    if reduce:
        # fold mlp Linear into the input projection (affine o affine, exact)
        w_ih_eff = params["w_mlp"] @ params["w_ih"]               # (D, 4H)
        b_eff = params["b_mlp"] @ params["w_ih"] + params["b"]    # (1, 4H)
    else:
        w_ih_eff = params["w_ih"]
        b_eff = params["b"]

    perm = jnp.array([0, 1, 3, 2])   # PyTorch [i,f,g,o] -> kernel [i,f,o,g]

    def pad_reorder_gates(w):        # (..., 4H) -> (..., 4*Hp)
        lead = w.shape[:-1]
        w4 = w.reshape(*lead, 4, H)[..., perm, :]
        w4 = jnp.pad(w4, [(0, 0)] * len(lead) + [(0, 0), (0, Hp - H)])
        return w4.reshape(*lead, 4 * Hp)

    w_ih_p = pad_reorder_gates(w_ih_eff).astype(jnp.bfloat16)            # (D, 4Hp)
    w_hh_p = jnp.pad(pad_reorder_gates(params["w_hh"]),
                     ((0, Hp - H), (0, 0))).astype(jnp.bfloat16)         # (Hp, 4Hp)
    b_p = pad_reorder_gates(b_eff)                                       # (1, 4Hp) f32
    w_out_row = jnp.pad(params["w_out"].T, ((0, 0), (0, Hp - H)))        # (1, Hp) f32
    b_out = params["b_out"].reshape((1,))                                # (1,) f32
    x_p = jnp.pad(x, ((0, Tp - T), (0, 0))).astype(jnp.bfloat16)         # (Tp, D)

    # ---- explicit VMEM budget (v5e default scoped VMEM is only 16 MiB) ----
    est = (x_p.size * 2 + w_ih_p.size * 2 + w_hh_p.size * 2
           + b_p.size * 4 + 8 * Hp * 4 + 8 * max(Tp, 128) * 4
           + Tp * 4 * Hp * 4 + Tp * Hp * 4)
    vmem_limit = int(min(max(2 * est, 32 << 20), 100 << 20))

    vmem = pl.BlockSpec(memory_space=pltpu.MemorySpace.VMEM)
    smem = pl.BlockSpec(memory_space=pltpu.MemorySpace.SMEM)

    out2d = pl.pallas_call(
        functools.partial(_lstm_regressor_kernel, Hp, block_t),
        out_shape=jax.ShapeDtypeStruct((1, Tp), jnp.float32),
        in_specs=[vmem,               # x (bf16)
                  vmem, vmem, vmem,   # w_ih, w_hh (bf16), b (f32)
                  vmem,               # w_out row (f32)
                  smem],              # b_out scalar
        out_specs=vmem,
        scratch_shapes=[pltpu.VMEM((Tp, 4 * Hp), jnp.float32),   # X_proj
                        pltpu.VMEM((Tp, Hp), jnp.float32)],      # hs
        compiler_params=pltpu.CompilerParams(vmem_limit_bytes=vmem_limit),
    )(x_p, w_ih_p, w_hh_p, b_p, w_out_row, b_out)
    return out2d[0, :T]   # .squeeze() of (T, 1) -> (T,)


def init_params(key, hidden_dim, input_dim, reduce, embedding_dim):
    """Deterministic synthetic params (PyTorch-style uniform(-1/sqrt(fan), ...))."""
    ks = jax.random.split(key, 8)
    d_lstm = embedding_dim if reduce else input_dim

    def u(k, shape, bound):
        return jax.random.uniform(k, shape, jnp.float32, -bound, bound)

    k_mlp = 1.0 / float(input_dim) ** 0.5
    k_lstm = 1.0 / float(hidden_dim) ** 0.5
    k_lin = 1.0 / float(hidden_dim) ** 0.5

    params = {
        # mlp: Linear(input_dim, embedding_dim) stored transposed: x @ W
        "w_mlp": u(ks[0], (input_dim, embedding_dim), k_mlp),
        "b_mlp": u(ks[1], (1, embedding_dim), k_mlp),
        # lstm: weight_ih (4H, D) / weight_hh (4H, H) stored transposed
        "w_ih": u(ks[2], (d_lstm, 4 * hidden_dim), k_lstm),
        "w_hh": u(ks[3], (hidden_dim, 4 * hidden_dim), k_lstm),
        # combined bias b_ih + b_hh
        "b": (u(ks[4], (1, 4 * hidden_dim), k_lstm)
              + u(ks[5], (1, 4 * hidden_dim), k_lstm)),
        # linear: Linear(hidden_dim, 1) stored transposed
        "w_out": u(ks[6], (hidden_dim, 1), k_lin),
        "b_out": u(ks[7], (1, 1), k_lin),
    }
    if not reduce:
        params["w_mlp"] = jnp.zeros((1, 1), jnp.float32)
        params["b_mlp"] = jnp.zeros((1, 1), jnp.float32)
    return params


def reference_forward(x, params, *, hidden_dim, reduce=False):
    """Pure-JAX f32 reference of the PyTorch forward (for correctness check)."""
    if reduce:
        x = x @ params["w_mlp"] + params["b_mlp"]
    H = hidden_dim

    def step(carry, x_t):
        h, c = carry
        gates = x_t @ params["w_ih"] + h @ params["w_hh"] + params["b"][0]
        i = jax.nn.sigmoid(gates[0:H])
        f = jax.nn.sigmoid(gates[H:2 * H])
        g = jnp.tanh(gates[2 * H:3 * H])
        o = jax.nn.sigmoid(gates[3 * H:4 * H])
        c = f * c + i * g
        h = o * jnp.tanh(c)
        return (h, c), h

    (_, _), hs = lax.scan(step, (jnp.zeros(H), jnp.zeros(H)), x)
    return (hs @ params["w_out"] + params["b_out"])[:, 0]


if __name__ == "__main__":
    # Small shapes consistent with the module's forward:
    #   yesterday: (T=8, input_dim=16), hidden_dim=32, reduce=True, embedding_dim=32
    T, input_dim, hidden_dim, embedding_dim = 8, 16, 32, 32
    reduce = True

    key = jax.random.PRNGKey(0)
    k_x, k_p = jax.random.split(key)
    yesterday = jax.random.normal(k_x, (T, input_dim), jnp.float32)
    params = init_params(k_p, hidden_dim, input_dim, reduce, embedding_dim)

    out = lstm_regressor_forward(yesterday, params,
                                 hidden_dim=hidden_dim, reduce=reduce)
    out = jax.block_until_ready(out)

    ref = reference_forward(yesterday, params,
                            hidden_dim=hidden_dim, reduce=reduce)
    assert out.shape == (T,), out.shape
    # bf16 MXU operands + host-side MLP fold change f32 rounding -> loosened tol
    assert jnp.allclose(out, ref, atol=2e-2, rtol=2e-2), (out, ref)

    print("KERNEL_OK")
</pallas_src>

<mosaic_0001>
module attributes {stable_mosaic.version = 11 : i64} {
  func.func @_lstm_regressor_kernel(%arg0: memref<8x16xbf16, #tpu.memory_space<vmem>>, %arg1: memref<16x512xbf16, #tpu.memory_space<vmem>>, %arg2: memref<128x512xbf16, #tpu.memory_space<vmem>>, %arg3: memref<1x512xf32, #tpu.memory_space<vmem>>, %arg4: memref<1x128xf32, #tpu.memory_space<vmem>>, %arg5: memref<1xf32, #tpu.memory_space<smem>>, %arg6: memref<1x8xf32, #tpu.memory_space<vmem>>, %arg7: memref<8x512xf32, #tpu.memory_space<vmem>>, %arg8: memref<8x128xf32, #tpu.memory_space<vmem>>) attributes {dimension_semantics = [], scalar_prefetch = 0 : i64, scratch_operands = 2 : i64, tpu.core_type = #tpu.core_type<tc>} {
    %c0 = arith.constant 0 : index
    %c0_0 = arith.constant 0 : index
    %0 = vector.load %arg0[%c0, %c0_0] : memref<8x16xbf16, #tpu.memory_space<vmem>>, vector<8x16xbf16>
    %c0_1 = arith.constant 0 : index
    %c0_2 = arith.constant 0 : index
    %1 = vector.load %arg1[%c0_1, %c0_2] : memref<16x512xbf16, #tpu.memory_space<vmem>>, vector<16x512xbf16>
    %cst = arith.constant dense<0.000000e+00> : vector<8x512xf32>
    %2 = tpu.matmul %0, %1, %cst {dimension_numbers = #tpu.dot_dimension_numbers<[1], [0], [0], [1], [0, 0, 1, 1], [], []>} : vector<8x16xbf16>, vector<16x512xbf16>, vector<8x512xf32> -> vector<8x512xf32>
    %c0_3 = arith.constant 0 : index
    %c0_4 = arith.constant 0 : index
    %3 = vector.load %arg3[%c0_3, %c0_4] : memref<1x512xf32, #tpu.memory_space<vmem>>, vector<1x512xf32>
    %4 = vector.broadcast %3 : vector<1x512xf32> to vector<8x512xf32>
    %5 = arith.addf %2, %4 : vector<8x512xf32>
    %c0_5 = arith.constant 0 : index
    %c0_6 = arith.constant 0 : index
    %6 = vector.load %arg7[%c0_5, %c0_6] : memref<8x512xf32, #tpu.memory_space<vmem>>, vector<8x512xf32>
    tpu.vector_store %arg7[%c0_5, %c0_6], %5 {strides = array<i32>} : memref<8x512xf32, #tpu.memory_space<vmem>>, vector<8x512xf32>,
    %cst_7 = arith.constant 0.000000e+00 : f32
    %7 = vector.broadcast %cst_7 : f32 to vector<1x128xf32>
    %cst_8 = arith.constant 0.000000e+00 : f32
    %8 = vector.broadcast %cst_8 : f32 to vector<1x128xf32>
    %c0_i32 = arith.constant 0 : i32
    %c8_i32 = arith.constant 8 : i32
    %9 = arith.muli %c0_i32, %c8_i32 : i32
    %10 = tpu.assume_multiple %9, 8 : i32
    %c0_9 = arith.constant 0 : index
    %c0_10 = arith.constant 0 : index
    %11 = vector.load %arg2[%c0_9, %c0_10] : memref<128x512xbf16, #tpu.memory_space<vmem>>, vector<128x512xbf16>
    %c0_i32_11 = arith.constant 0 : i32
    %12 = arith.addi %10, %c0_i32_11 : i32
    %13 = arith.index_cast %12 : i32 to index
    %c0_12 = arith.constant 0 : index
    %14 = vector.load %arg7[%13, %c0_12] : memref<8x512xf32, #tpu.memory_space<vmem>>, vector<1x512xf32>
    %15 = arith.truncf %7 : vector<1x128xf32> to vector<1x128xbf16>
    %cst_13 = arith.constant dense<0.000000e+00> : vector<1x512xf32>
    %16 = tpu.matmul %15, %11, %cst_13 {dimension_numbers = #tpu.dot_dimension_numbers<[1], [0], [0], [1], [0, 0, 1, 1], [], []>} : vector<1x128xbf16>, vector<128x512xbf16>, vector<1x512xf32> -> vector<1x512xf32>
    %17 = arith.addf %14, %16 : vector<1x512xf32>
    %18 = vector.extract_strided_slice %17 {offsets = [0, 0], sizes = [1, 384], strides = [1, 1]} : vector<1x512xf32> to vector<1x384xf32>
    %cst_14 = arith.constant 5.000000e-01 : f32
    %19 = vector.broadcast %cst_14 : f32 to vector<1x384xf32>
    %20 = arith.mulf %19, %18 : vector<1x384xf32>
    %21 = math.tanh %20 : vector<1x384xf32>
    %cst_15 = arith.constant 5.000000e-01 : f32
    %22 = vector.broadcast %cst_15 : f32 to vector<1x384xf32>
    %23 = arith.mulf %22, %21 : vector<1x384xf32>
    %cst_16 = arith.constant 5.000000e-01 : f32
    %24 = vector.broadcast %cst_16 : f32 to vector<1x384xf32>
    %25 = arith.addf %23, %24 : vector<1x384xf32>
    %26 = vector.extract_strided_slice %25 {offsets = [0, 0], sizes = [1, 128], strides = [1, 1]} : vector<1x384xf32> to vector<1x128xf32>
    %27 = vector.extract_strided_slice %25 {offsets = [0, 128], sizes = [1, 128], strides = [1, 1]} : vector<1x384xf32> to vector<1x128xf32>
    %28 = vector.extract_strided_slice %25 {offsets = [0, 256], sizes = [1, 128], strides = [1, 1]} : vector<1x384xf32> to vector<1x128xf32>
    %29 = vector.extract_strided_slice %17 {offsets = [0, 384], sizes = [1, 128], strides = [1, 1]} : vector<1x512xf32> to vector<1x128xf32>
    %30 = math.tanh %29 : vector<1x128xf32>
    %31 = arith.mulf %27, %8 : vector<1x128xf32>
    %32 = arith.mulf %26, %30 : vector<1x128xf32>
    %33 = arith.addf %31, %32 : vector<1x128xf32>
    %34 = math.tanh %33 : vector<1x128xf32>
    %35 = arith.mulf %28, %34 : vector<1x128xf32>
    %c1_i32 = arith.constant 1 : i32
    %36 = arith.addi %10, %c1_i32 : i32
    %37 = arith.index_cast %36 : i32 to index
    %c0_17 = arith.constant 0 : index
    %38 = vector.load %arg7[%37, %c0_17] : memref<8x512xf32, #tpu.memory_space<vmem>>, vector<1x512xf32>
    %39 = arith.truncf %35 : vector<1x128xf32> to vector<1x128xbf16>
    %cst_18 = arith.constant dense<0.000000e+00> : vector<1x512xf32>
    %40 = tpu.matmul %39, %11, %cst_18 {dimension_numbers = #tpu.dot_dimension_numbers<[1], [0], [0], [1], [0, 0, 1, 1], [], []>} : vector<1x128xbf16>, vector<128x512xbf16>, vector<1x512xf32> -> vector<1x512xf32>
    %41 = arith.addf %38, %40 : vector<1x512xf32>
    %42 = vector.extract_strided_slice %41 {offsets = [0, 0], sizes = [1, 384], strides = [1, 1]} : vector<1x512xf32> to vector<1x384xf32>
    %cst_19 = arith.constant 5.000000e-01 : f32
    %43 = vector.broadcast %cst_19 : f32 to vector<1x384xf32>
    %44 = arith.mulf %43, %42 : vector<1x384xf32>
    %45 = math.tanh %44 : vector<1x384xf32>
    %cst_20 = arith.constant 5.000000e-01 : f32
    %46 = vector.broadcast %cst_20 : f32 to vector<1x384xf32>
    %47 = arith.mulf %46, %45 : vector<1x384xf32>
    %cst_21 = arith.constant 5.000000e-01 : f32
    %48 = vector.broadcast %cst_21 : f32 to vector<1x384xf32>
    %49 = arith.addf %47, %48 : vector<1x384xf32>
    %50 = vector.extract_strided_slice %49 {offsets = [0, 0], sizes = [1, 128], strides = [1, 1]} : vector<1x384xf32> to vector<1x128xf32>
    %51 = vector.extract_strided_slice %49 {offsets = [0, 128], sizes = [1, 128], strides = [1, 1]} : vector<1x384xf32> to vector<1x128xf32>
    %52 = vector.extract_strided_slice %49 {offsets = [0, 256], sizes = [1, 128], strides = [1, 1]} : vector<1x384xf32> to vector<1x128xf32>
    %53 = vector.extract_strided_slice %41 {offsets = [0, 384], sizes = [1, 128], strides = [1, 1]} : vector<1x512xf32> to vector<1x128xf32>
    %54 = math.tanh %53 : vector<1x128xf32>
    %55 = arith.mulf %51, %33 : vector<1x128xf32>
    %56 = arith.mulf %50, %54 : vector<1x128xf32>
    %57 = arith.addf %55, %56 : vector<1x128xf32>
    %58 = math.tanh %57 : vector<1x128xf32>
    %59 = arith.mulf %52, %58 : vector<1x128xf32>
    %c2_i32 = arith.constant 2 : i32
    %60 = arith.addi %10, %c2_i32 : i32
    %61 = arith.index_cast %60 : i32 to index
    %c0_22 = arith.constant 0 : index
    %62 = vector.load %arg7[%61, %c0_22] : memref<8x512xf32, #tpu.memory_space<vmem>>, vector<1x512xf32>
    %63 = arith.truncf %59 : vector<1x128xf32> to vector<1x128xbf16>
    %cst_23 = arith.constant dense<0.000000e+00> : vector<1x512xf32>
    %64 = tpu.matmul %63, %11, %cst_23 {dimension_numbers = #tpu.dot_dimension_numbers<[1], [0], [0], [1], [0, 0, 1, 1], [], []>} : vector<1x128xbf16>, vector<128x512xbf16>, vector<1x512xf32> -> vector<1x512xf32>
    %65 = arith.addf %62, %64 : vector<1x512xf32>
    %66 = vector.extract_strided_slice %65 {offsets = [0, 0], sizes = [1, 384], strides = [1, 1]} : vector<1x512xf32> to vector<1x384xf32>
    %cst_24 = arith.constant 5.000000e-01 : f32
    %67 = vector.broadcast %cst_24 : f32 to vector<1x384xf32>
    %68 = arith.mulf %67, %66 : vector<1x384xf32>
    %69 = math.tanh %68 : vector<1x384xf32>
    %cst_25 = arith.constant 5.000000e-01 : f32
    %70 = vector.broadcast %cst_25 : f32 to vector<1x384xf32>
    %71 = arith.mulf %70, %69 : vector<1x384xf32>
    %cst_26 = arith.constant 5.000000e-01 : f32
    %72 = vector.broadcast %cst_26 : f32 to vector<1x384xf32>
    %73 = arith.addf %71, %72 : vector<1x384xf32>
    %74 = vector.extract_strided_slice %73 {offsets = [0, 0], sizes = [1, 128], strides = [1, 1]} : vector<1x384xf32> to vector<1x128xf32>
    %75 = vector.extract_strided_slice %73 {offsets = [0, 128], sizes = [1, 128], strides = [1, 1]} : vector<1x384xf32> to vector<1x128xf32>
    %76 = vector.extract_strided_slice %73 {offsets = [0, 256], sizes = [1, 128], strides = [1, 1]} : vector<1x384xf32> to vector<1x128xf32>
    %77 = vector.extract_strided_slice %65 {offsets = [0, 384], sizes = [1, 128], strides = [1, 1]} : vector<1x512xf32> to vector<1x128xf32>
    %78 = math.tanh %77 : vector<1x128xf32>
    %79 = arith.mulf %75, %57 : vector<1x128xf32>
    %80 = arith.mulf %74, %78 : vector<1x128xf32>
    %81 = arith.addf %79, %80 : vector<1x128xf32>
    %82 = math.tanh %81 : vector<1x128xf32>
    %83 = arith.mulf %76, %82 : vector<1x128xf32>
    %c3_i32 = arith.constant 3 : i32
    %84 = arith.addi %10, %c3_i32 : i32
    %85 = arith.index_cast %84 : i32 to index
    %c0_27 = arith.constant 0 : index
    %86 = vector.load %arg7[%85, %c0_27] : memref<8x512xf32, #tpu.memory_space<vmem>>, vector<1x512xf32>
    %87 = arith.truncf %83 : vector<1x128xf32> to vector<1x128xbf16>
    %cst_28 = arith.constant dense<0.000000e+00> : vector<1x512xf32>
    %88 = tpu.matmul %87, %11, %cst_28 {dimension_numbers = #tpu.dot_dimension_numbers<[1], [0], [0], [1], [0, 0, 1, 1], [], []>} : vector<1x128xbf16>, vector<128x512xbf16>, vector<1x512xf32> -> vector<1x512xf32>
    %89 = arith.addf %86, %88 : vector<1x512xf32>
    %90 = vector.extract_strided_slice %89 {offsets = [0, 0], sizes = [1, 384], strides = [1, 1]} : vector<1x512xf32> to vector<1x384xf32>
    %cst_29 = arith.constant 5.000000e-01 : f32
    %91 = vector.broadcast %cst_29 : f32 to vector<1x384xf32>
    %92 = arith.mulf %91, %90 : vector<1x384xf32>
    %93 = math.tanh %92 : vector<1x384xf32>
    %cst_30 = arith.constant 5.000000e-01 : f32
    %94 = vector.broadcast %cst_30 : f32 to vector<1x384xf32>
    %95 = arith.mulf %94, %93 : vector<1x384xf32>
    %cst_31 = arith.constant 5.000000e-01 : f32
    %96 = vector.broadcast %cst_31 : f32 to vector<1x384xf32>
    %97 = arith.addf %95, %96 : vector<1x384xf32>
    %98 = vector.extract_strided_slice %97 {offsets = [0, 0], sizes = [1, 128], strides = [1, 1]} : vector<1x384xf32> to vector<1x128xf32>
    %99 = vector.extract_strided_slice %97 {offsets = [0, 128], sizes = [1, 128], strides = [1, 1]} : vector<1x384xf32> to vector<1x128xf32>
    %100 = vector.extract_strided_slice %97 {offsets = [0, 256], sizes = [1, 128], strides = [1, 1]} : vector<1x384xf32> to vector<1x128xf32>
    %101 = vector.extract_strided_slice %89 {offsets = [0, 384], sizes = [1, 128], strides = [1, 1]} : vector<1x512xf32> to vector<1x128xf32>
    %102 = math.tanh %101 : vector<1x128xf32>
    %103 = arith.mulf %99, %81 : vector<1x128xf32>
    %104 = arith.mulf %98, %102 : vector<1x128xf32>
    %105 = arith.addf %103, %104 : vector<1x128xf32>
    %106 = math.tanh %105 : vector<1x128xf32>
    %107 = arith.mulf %100, %106 : vector<1x128xf32>
    %c4_i32 = arith.constant 4 : i32
    %108 = arith.addi %10, %c4_i32 : i32
    %109 = arith.index_cast %108 : i32 to index
    %c0_32 = arith.constant 0 : index
    %110 = vector.load %arg7[%109, %c0_32] : memref<8x512xf32, #tpu.memory_space<vmem>>, vector<1x512xf32>
    %111 = arith.truncf %107 : vector<1x128xf32> to vector<1x128xbf16>
    %cst_33 = arith.constant dense<0.000000e+00> : vector<1x512xf32>
    %112 = tpu.matmul %111, %11, %cst_33 {dimension_numbers = #tpu.dot_dimension_numbers<[1], [0], [0], [1], [0, 0, 1, 1], [], []>} : vector<1x128xbf16>, vector<128x512xbf16>, vector<1x512xf32> -> vector<1x512xf32>
    %113 = arith.addf %110, %112 : vector<1x512xf32>
    %114 = vector.extract_strided_slice %113 {offsets = [0, 0], sizes = [1, 384], strides = [1, 1]} : vector<1x512xf32> to vector<1x384xf32>
    %cst_34 = arith.constant 5.000000e-01 : f32
    %115 = vector.broadcast %cst_34 : f32 to vector<1x384xf32>
    %116 = arith.mulf %115, %114 : vector<1x384xf32>
    %117 = math.tanh %116 : vector<1x384xf32>
    %cst_35 = arith.constant 5.000000e-01 : f32
    %118 = vector.broadcast %cst_35 : f32 to vector<1x384xf32>
    %119 = arith.mulf %118, %117 : vector<1x384xf32>
    %cst_36 = arith.constant 5.000000e-01 : f32
    %120 = vector.broadcast %cst_36 : f32 to vector<1x384xf32>
    %121 = arith.addf %119, %120 : vector<1x384xf32>
    %122 = vector.extract_strided_slice %121 {offsets = [0, 0], sizes = [1, 128], strides = [1, 1]} : vector<1x384xf32> to vector<1x128xf32>
    %123 = vector.extract_strided_slice %121 {offsets = [0, 128], sizes = [1, 128], strides = [1, 1]} : vector<1x384xf32> to vector<1x128xf32>
    %124 = vector.extract_strided_slice %121 {offsets = [0, 256], sizes = [1, 128], strides = [1, 1]} : vector<1x384xf32> to vector<1x128xf32>
    %125 = vector.extract_strided_slice %113 {offsets = [0, 384], sizes = [1, 128], strides = [1, 1]} : vector<1x512xf32> to vector<1x128xf32>
    %126 = math.tanh %125 : vector<1x128xf32>
    %127 = arith.mulf %123, %105 : vector<1x128xf32>
    %128 = arith.mulf %122, %126 : vector<1x128xf32>
    %129 = arith.addf %127, %128 : vector<1x128xf32>
    %130 = math.tanh %129 : vector<1x128xf32>
    %131 = arith.mulf %124, %130 : vector<1x128xf32>
    %c5_i32 = arith.constant 5 : i32
    %132 = arith.addi %10, %c5_i32 : i32
    %133 = arith.index_cast %132 : i32 to index
    %c0_37 = arith.constant 0 : index
    %134 = vector.load %arg7[%133, %c0_37] : memref<8x512xf32, #tpu.memory_space<vmem>>, vector<1x512xf32>
    %135 = arith.truncf %131 : vector<1x128xf32> to vector<1x128xbf16>
    %cst_38 = arith.constant dense<0.000000e+00> : vector<1x512xf32>
    %136 = tpu.matmul %135, %11, %cst_38 {dimension_numbers = #tpu.dot_dimension_numbers<[1], [0], [0], [1], [0, 0, 1, 1], [], []>} : vector<1x128xbf16>, vector<128x512xbf16>, vector<1x512xf32> -> vector<1x512xf32>
    %137 = arith.addf %134, %136 : vector<1x512xf32>
    %138 = vector.extract_strided_slice %137 {offsets = [0, 0], sizes = [1, 384], strides = [1, 1]} : vector<1x512xf32> to vector<1x384xf32>
    %cst_39 = arith.constant 5.000000e-01 : f32
    %139 = vector.broadcast %cst_39 : f32 to vector<1x384xf32>
    %140 = arith.mulf %139, %138 : vector<1x384xf32>
    %141 = math.tanh %140 : vector<1x384xf32>
    %cst_40 = arith.constant 5.000000e-01 : f32
    %142 = vector.broadcast %cst_40 : f32 to vector<1x384xf32>
    %143 = arith.mulf %142, %141 : vector<1x384xf32>
    %cst_41 = arith.constant 5.000000e-01 : f32
    %144 = vector.broadcast %cst_41 : f32 to vector<1x384xf32>
    %145 = arith.addf %143, %144 : vector<1x384xf32>
    %146 = vector.extract_strided_slice %145 {offsets = [0, 0], sizes = [1, 128], strides = [1, 1]} : vector<1x384xf32> to vector<1x128xf32>
    %147 = vector.extract_strided_slice %145 {offsets = [0, 128], sizes = [1, 128], strides = [1, 1]} : vector<1x384xf32> to vector<1x128xf32>
    %148 = vector.extract_strided_slice %145 {offsets = [0, 256], sizes = [1, 128], strides = [1, 1]} : vector<1x384xf32> to vector<1x128xf32>
    %149 = vector.extract_strided_slice %137 {offsets = [0, 384], sizes = [1, 128], strides = [1, 1]} : vector<1x512xf32> to vector<1x128xf32>
    %150 = math.tanh %149 : vector<1x128xf32>
    %151 = arith.mulf %147, %129 : vector<1x128xf32>
    %152 = arith.mulf %146, %150 : vector<1x128xf32>
    %153 = arith.addf %151, %152 : vector<1x128xf32>
    %154 = math.tanh %153 : vector<1x128xf32>
    %155 = arith.mulf %148, %154 : vector<1x128xf32>
    %c6_i32 = arith.constant 6 : i32
    %156 = arith.addi %10, %c6_i32 : i32
    %157 = arith.index_cast %156 : i32 to index
    %c0_42 = arith.constant 0 : index
    %158 = vector.load %arg7[%157, %c0_42] : memref<8x512xf32, #tpu.memory_space<vmem>>, vector<1x512xf32>
    %159 = arith.truncf %155 : vector<1x128xf32> to vector<1x128xbf16>
    %cst_43 = arith.constant dense<0.000000e+00> : vector<1x512xf32>
    %160 = tpu.matmul %159, %11, %cst_43 {dimension_numbers = #tpu.dot_dimension_numbers<[1], [0], [0], [1], [0, 0, 1, 1], [], []>} : vector<1x128xbf16>, vector<128x512xbf16>, vector<1x512xf32> -> vector<1x512xf32>
    %161 = arith.addf %158, %160 : vector<1x512xf32>
    %162 = vector.extract_strided_slice %161 {offsets = [0, 0], sizes = [1, 384], strides = [1, 1]} : vector<1x512xf32> to vector<1x384xf32>
    %cst_44 = arith.constant 5.000000e-01 : f32
    %163 = vector.broadcast %cst_44 : f32 to vector<1x384xf32>
    %164 = arith.mulf %163, %162 : vector<1x384xf32>
    %165 = math.tanh %164 : vector<1x384xf32>
    %cst_45 = arith.constant 5.000000e-01 : f32
    %166 = vector.broadcast %cst_45 : f32 to vector<1x384xf32>
    %167 = arith.mulf %166, %165 : vector<1x384xf32>
    %cst_46 = arith.constant 5.000000e-01 : f32
    %168 = vector.broadcast %cst_46 : f32 to vector<1x384xf32>
    %169 = arith.addf %167, %168 : vector<1x384xf32>
    %170 = vector.extract_strided_slice %169 {offsets = [0, 0], sizes = [1, 128], strides = [1, 1]} : vector<1x384xf32> to vector<1x128xf32>
    %171 = vector.extract_strided_slice %169 {offsets = [0, 128], sizes = [1, 128], strides = [1, 1]} : vector<1x384xf32> to vector<1x128xf32>
    %172 = vector.extract_strided_slice %169 {offsets = [0, 256], sizes = [1, 128], strides = [1, 1]} : vector<1x384xf32> to vector<1x128xf32>
    %173 = vector.extract_strided_slice %161 {offsets = [0, 384], sizes = [1, 128], strides = [1, 1]} : vector<1x512xf32> to vector<1x128xf32>
    %174 = math.tanh %173 : vector<1x128xf32>
    %175 = arith.mulf %171, %153 : vector<1x128xf32>
    %176 = arith.mulf %170, %174 : vector<1x128xf32>
    %177 = arith.addf %175, %176 : vector<1x128xf32>
    %178 = math.tanh %177 : vector<1x128xf32>
    %179 = arith.mulf %172, %178 : vector<1x128xf32>
    %c7_i32 = arith.constant 7 : i32
    %180 = arith.addi %10, %c7_i32 : i32
    %181 = arith.index_cast %180 : i32 to index
    %c0_47 = arith.constant 0 : index
    %182 = vector.load %arg7[%181, %c0_47] : memref<8x512xf32, #tpu.memory_space<vmem>>, vector<1x512xf32>
    %183 = arith.truncf %179 : vector<1x128xf32> to vector<1x128xbf16>
    %cst_48 = arith.constant dense<0.000000e+00> : vector<1x512xf32>
    %184 = tpu.matmul %183, %11, %cst_48 {dimension_numbers = #tpu.dot_dimension_numbers<[1], [0], [0], [1], [0, 0, 1, 1], [], []>} : vector<1x128xbf16>, vector<128x512xbf16>, vector<1x512xf32> -> vector<1x512xf32>
    %185 = arith.addf %182, %184 : vector<1x512xf32>
    %186 = vector.extract_strided_slice %185 {offsets = [0, 0], sizes = [1, 384], strides = [1, 1]} : vector<1x512xf32> to vector<1x384xf32>
    %cst_49 = arith.constant 5.000000e-01 : f32
    %187 = vector.broadcast %cst_49 : f32 to vector<1x384xf32>
    %188 = arith.mulf %187, %186 : vector<1x384xf32>
    %189 = math.tanh %188 : vector<1x384xf32>
    %cst_50 = arith.constant 5.000000e-01 : f32
    %190 = vector.broadcast %cst_50 : f32 to vector<1x384xf32>
    %191 = arith.mulf %190, %189 : vector<1x384xf32>
    %cst_51 = arith.constant 5.000000e-01 : f32
    %192 = vector.broadcast %cst_51 : f32 to vector<1x384xf32>
    %193 = arith.addf %191, %192 : vector<1x384xf32>
    %194 = vector.extract_strided_slice %193 {offsets = [0, 0], sizes = [1, 128], strides = [1, 1]} : vector<1x384xf32> to vector<1x128xf32>
    %195 = vector.extract_strided_slice %193 {offsets = [0, 128], sizes = [1, 128], strides = [1, 1]} : vector<1x384xf32> to vector<1x128xf32>
    %196 = vector.extract_strided_slice %193 {offsets = [0, 256], sizes = [1, 128], strides = [1, 1]} : vector<1x384xf32> to vector<1x128xf32>
    %197 = vector.extract_strided_slice %185 {offsets = [0, 384], sizes = [1, 128], strides = [1, 1]} : vector<1x512xf32> to vector<1x128xf32>
    %198 = math.tanh %197 : vector<1x128xf32>
    %199 = arith.mulf %195, %177 : vector<1x128xf32>
    %200 = arith.mulf %194, %198 : vector<1x128xf32>
    %201 = arith.addf %199, %200 : vector<1x128xf32>
    %202 = math.tanh %201 : vector<1x128xf32>
    %203 = arith.mulf %196, %202 : vector<1x128xf32>
    %204 = tpu.concatenate %35, %59, %83, %107, %131, %155, %179, %203 in 0 : vector<1x128xf32>, vector<1x128xf32>, vector<1x128xf32>, vector<1x128xf32>, vector<1x128xf32>, vector<1x128xf32>, vector<1x128xf32>, vector<1x128xf32> -> vector<8x128xf32>
    %205 = arith.index_cast %10 : i32 to index
    %c0_52 = arith.constant 0 : index
    %206 = vector.load %arg8[%205, %c0_52] : memref<8x128xf32, #tpu.memory_space<vmem>>, vector<8x128xf32>
    tpu.vector_store %arg8[%205, %c0_52], %204 {strides = array<i32>} : memref<8x128xf32, #tpu.memory_space<vmem>>, vector<8x128xf32>,
    %c1_i32_53 = arith.constant 1 : i32
    %c0_54 = arith.constant 0 : index
    %c0_55 = arith.constant 0 : index
    %207 = vector.load %arg4[%c0_54, %c0_55] : memref<1x128xf32, #tpu.memory_space<vmem>>, vector<1x128xf32>
    %c0_56 = arith.constant 0 : index
    %c0_57 = arith.constant 0 : index
    %208 = vector.load %arg8[%c0_56, %c0_57] : memref<8x128xf32, #tpu.memory_space<vmem>>, vector<8x128xf32>
    %cst_58 = arith.constant dense<0.000000e+00> : vector<1x8xf32>
    %209 = tpu.matmul %207, %208, %cst_58 {dimension_numbers = #tpu.dot_dimension_numbers<[1], [1], [0], [0], [0, 0, 1, 0], [], []>} : vector<1x128xf32>, vector<8x128xf32>, vector<1x8xf32> -> vector<1x8xf32>
    %c0_59 = arith.constant 0 : index
    %210 = memref.load %arg5[%c0_59] : memref<1xf32, #tpu.memory_space<smem>>
    %211 = vector.broadcast %210 : f32 to vector<1x8xf32>
    %212 = arith.addf %209, %211 : vector<1x8xf32>
    %c0_60 = arith.constant 0 : index
    %c0_61 = arith.constant 0 : index
    %213 = vector.load %arg6[%c0_60, %c0_61] : memref<1x8xf32, #tpu.memory_space<vmem>>, vector<1x8xf32>
    tpu.vector_store %arg6[%c0_60, %c0_61], %212 {strides = array<i32>} : memref<1x8xf32, #tpu.memory_space<vmem>>, vector<1x8xf32>,
    return
  }
}

</mosaic_0001>

<llo_original>
// kernel: tpu_custom_call.1
$region0: #{tpu_custom_call.1}
  #allocation0 [shape = 'u32[]', space=smem, size = 0x4, offset = 0x4, fixed_abs, tag = 'smem constant byte address 0x4 - core index']
  #allocation1 [shape = 'u32[72,128]{1,0:T(1,128)}', space=vmem, size = 0x9000, scoped, tag = 'internal scratch']
  #allocation2 [shape = 'f32[8,512]{1,0:T(8,128)}', space=vmem, size = 0x4000, scoped, tag = 'scratch operand']
  #allocation3 [shape = 'f32[8,128]{1,0:T(8,128)}', space=vmem, size = 0x1000, scoped, tag = 'scratch operand']
  #allocation4 [shape = 'f32[1]{0:T(128)S(6)}', space=smem, size = 0x200, scoped, tag = 'scoped memory for tpu_custom_call.1']
  %s0 = inlined_call_operand.hbm [shape: bf16[8,16], index: 0, kind: input, shape index: {}]
  %s1 = inlined_call_operand.hbm [shape: bf16[16,512], index: 1, kind: input, shape index: {}]
  %s2 = inlined_call_operand.hbm [shape: bf16[128,512], index: 2, kind: input, shape index: {}]
  %s3 = inlined_call_operand.vmem [shape: f32[1,512], index: 3, kind: input, shape index: {}]
  %s4 = inlined_call_operand.vmem [shape: f32[1,128], index: 4, kind: input, shape index: {}]
  %s5 = inlined_call_operand.<no memory space> [shape: f32[1], index: 5, kind: input, shape index: {}]
  %s6 = inlined_call_operand.hbm [shape: f32[1,8], index: 6, kind: output, shape index: {}]
  %s7 = sld [smem:[#allocation0]]
  $region46: #{tpu_custom_call.1} parent=0
    _
  %s9 = ssub.s32 1, %s7
  %s10 = scalar_select 0, %s9, %s7
  %11 = sst [smem:[#allocation4]] %s5
  $region1: #{tpu_custom_call.1} parent=0
    #allocation5 [shape = 'u8[2048]{0}', space=vmem, size = 0x800, scoped, tag = 'input window, operand 0, single buffered']
    #allocation6 [shape = 's32[1]{0}', space=sflag, size = 0x4, scoped, tag = 'scoped memory for tpu_custom_call.1']
    #allocation7 [shape = 's32[1]{0}', space=sflag, size = 0x4, scoped, tag = 'scoped memory for tpu_custom_call.1']
    #allocation8 [shape = 'u8[16384]{0}', space=vmem, size = 0x4000, scoped, tag = 'input window, operand 1, single buffered']
    #allocation9 [shape = 's32[1]{0}', space=sflag, size = 0x4, scoped, tag = 'scoped memory for tpu_custom_call.1']
    #allocation10 [shape = 'u8[131072]{0}', space=vmem, size = 0x20000, scoped, tag = 'input window, operand 2, single buffered']
    #allocation11 [shape = 'u8[512]{0}', space=vmem, size = 0x400, scoped, tag = 'output window, operand 0, single buffered']
    %12 = vsyncpa [#allocation6], 0
    %13 = vsyncpa [#allocation9], 0
    %14 = vsyncpa [#allocation7], 0
    // Predicated region
    $region2: #{tpu_custom_call.1} parent=1 // pred_check
      _
    $region3: #{tpu_custom_call.1} parent=1 // pred_check_branch
      %16 = sbr.rel (0) target = $region5
    $region4: #{tpu_custom_call.1} parent=1 // pred_region
      %18 = vsyncadd [#allocation6], 0
      %s20 = sshll.u32 %s0, 4
      %s21 = int_to_ptr.hbm [resolvable:$true] %s20
      %s22 = sshll.u32 [#allocation5], 4
      %s23 = int_to_ptr.vmem [resolvable:$true] %s22
      %25 = dma.hbm_to_vmem [thread:$0]  %s21, 64, %s23, [#allocation6]
    $region5: #{tpu_custom_call.1} parent=1 // pred_fallthru
      _
    // Predicated region
    $region6: #{tpu_custom_call.1} parent=1 // pred_check
      _
    $region7: #{tpu_custom_call.1} parent=1 // pred_check_branch
      %27 = sbr.rel (0) target = $region9
    $region8: #{tpu_custom_call.1} parent=1 // pred_region
      %29 = vsyncadd [#allocation9], 0
      %s30 = sshll.u32 %s1, 4
      %s31 = int_to_ptr.hbm [resolvable:$true] %s30
      %s32 = sshll.u32 [#allocation8], 4
      %s33 = int_to_ptr.vmem [resolvable:$true] %s32
      %38 = dma.hbm_to_vmem [thread:$0]  %s31, 512, %s33, [#allocation9], 256, 256, 16
    $region9: #{tpu_custom_call.1} parent=1 // pred_fallthru
      _
    // Predicated region
    $region10: #{tpu_custom_call.1} parent=1 // pred_check
      _
    $region11: #{tpu_custom_call.1} parent=1 // pred_check_branch
      %40 = sbr.rel (0) target = $region13
    $region12: #{tpu_custom_call.1} parent=1 // pred_region
      %42 = vsyncadd [#allocation9], 0
      %s43 = sshll.u32 %s2, 4
      %s44 = int_to_ptr.hbm [resolvable:$true] %s43
      %s45 = sshll.u32 [#allocation10], 4
      %s46 = int_to_ptr.vmem [resolvable:$true] %s45
      %51 = dma.hbm_to_vmem [thread:$0]  %s44, 4096, %s46, [#allocation9], 256, 256, 16
    $region13: #{tpu_custom_call.1} parent=1 // pred_fallthru
      _
    // Predicated region
    $region14: #{tpu_custom_call.1} parent=1 // pred_check
      _
    $region15: #{tpu_custom_call.1} parent=1 // pred_check_branch
      %53 = sbr.rel (0) target = $region17
    $region16: #{tpu_custom_call.1} parent=1 // pred_region
      _
    $region17: #{tpu_custom_call.1} parent=1 // pred_fallthru
      _
    // Predicated region
    $region18: #{tpu_custom_call.1} parent=1 // pred_check
      _
    $region19: #{tpu_custom_call.1} parent=1 // pred_check_branch
      %55 = sbr.rel (0) target = $region21
    $region20: #{tpu_custom_call.1} parent=1 // pred_region
      _
    $region21: #{tpu_custom_call.1} parent=1 // pred_fallthru
      _
    // Predicated region
    $region22: #{tpu_custom_call.1} parent=1 // pred_check
      _
    $region23: #{tpu_custom_call.1} parent=1 // pred_check_branch
      %57 = sbr.rel (0) target = $region25
    $region24: #{tpu_custom_call.1} parent=1 // pred_region
      _
    $region25: #{tpu_custom_call.1} parent=1 // pred_fallthru
      _
    // Predicated region
    $region26: #{tpu_custom_call.1} parent=1 // pred_check
      _
    $region27: #{tpu_custom_call.1} parent=1 // pred_check_branch
      %59 = sbr.rel (0) target = $region29
    $region28: #{tpu_custom_call.1} parent=1 // pred_region
      %61 = dma.done [#allocation6], 64
    $region29: #{tpu_custom_call.1} parent=1 // pred_fallthru
      _
    // Predicated region
    $region30: #{tpu_custom_call.1} parent=1 // pred_check
      _
    $region31: #{tpu_custom_call.1} parent=1 // pred_check_branch
      %63 = sbr.rel (0) target = $region33
    $region32: #{tpu_custom_call.1} parent=1 // pred_region
      %65 = dma.done [#allocation9], 512
    $region33: #{tpu_custom_call.1} parent=1 // pred_fallthru
      _
    // Predicated region
    $region34: #{tpu_custom_call.1} parent=1 // pred_check
      _
    $region35: #{tpu_custom_call.1} parent=1 // pred_check_branch
      %67 = sbr.rel (0) target = $region37
    $region36: #{tpu_custom_call.1} parent=1 // pred_region
      %69 = dma.done [#allocation9], 4096
    $region37: #{tpu_custom_call.1} parent=1 // pred_fallthru
      _
    %v71 = vld [vmem:[#allocation5] sm:$0xf]
    %v72 = vld [vmem:[#allocation8] sm:$0xff]
    %v73 = vld [vmem:[#allocation8 + $0x8] sm:$0xff]
    %v74 = vld [vmem:[#allocation8 + $0x10] sm:$0xff]
    %v75 = vld [vmem:[#allocation8 + $0x18] sm:$0xff]
    %v76 = vld [vmem:[%s3] sm:$0xf]
    %v78 = vperm.slane %v76, 0
    %v79 = vperm.slane %v76, 1
    %v80 = vperm.slane %v76, 2
    %v81 = vperm.slane %v76, 3
    %v90 = vunpack.c.l.b16 %v72
    %v91 = vunpack.c.h.b16 %v72
    %v92 = vunpack.c.l.b16 %v73
    %v93 = vunpack.c.h.b16 %v73
    %v94 = vunpack.c.l.b16 %v74
    %v95 = vunpack.c.h.b16 %v74
    %v96 = vunpack.c.l.b16 %v75
    %v97 = vunpack.c.h.b16 %v75
    %v98 = vpack.c.b16 %v94, %v90
    %v99 = vpack.c.b16 %v95, %v91
    %v100 = vpack.c.b16 %v96, %v92
    %v101 = vpack.c.b16 %v97, %v93
    %vm106 = vcmask 130048
    %v108 = vsel %vm106, %v71, 0
    %110 = vmatpush.bf16.msra.mxu0 0
    %111 = vmatpush.bf16.msra.mxu0 0
    %112 = vmatpush.bf16.msra.mxu0 0
    %113 = vmatpush.bf16.msra.mxu0 0
    %114 = vmatpush.bf16.msra.mxu0 0
    %115 = vmatpush.bf16.msra.mxu0 0
    %116 = vmatpush.bf16.msra.mxu0 0
    %117 = vmatpush.bf16.msra.mxu0 %v98
    %118 = vmatmul.bf16.gmra.mxu0 %v108
    %v119 = vpop.f32.mrf.mxu0
    %v120 = vadd.f32 %v78, %v119
    %v121 = vpop.f32.mrf.mxu0
    %122 = vdwg.mxu0
    %123 = vmatpush.bf16.msra.mxu0 0
    %124 = vmatpush.bf16.msra.mxu0 0
    %125 = vmatpush.bf16.msra.mxu0 0
    %126 = vmatpush.bf16.msra.mxu0 0
    %127 = vmatpush.bf16.msra.mxu0 0
    %128 = vmatpush.bf16.msra.mxu0 0
    %129 = vmatpush.bf16.msra.mxu0 0
    %130 = vmatpush.bf16.msra.mxu0 %v99
    %131 = vmatmul.bf16.gmra.mxu0 %v108
    %v132 = vpop.f32.mrf.mxu0
    %v133 = vadd.f32 %v79, %v132
    %v134 = vpop.f32.mrf.mxu0
    %135 = vdwg.mxu0
    %136 = vmatpush.bf16.msra.mxu0 0
    %137 = vmatpush.bf16.msra.mxu0 0
    %138 = vmatpush.bf16.msra.mxu0 0
    %139 = vmatpush.bf16.msra.mxu0 0
    %140 = vmatpush.bf16.msra.mxu0 0
    %141 = vmatpush.bf16.msra.mxu0 0
    %142 = vmatpush.bf16.msra.mxu0 0
    %143 = vmatpush.bf16.msra.mxu0 %v100
    %144 = vmatmul.bf16.gmra.mxu0 %v108
    %v145 = vpop.f32.mrf.mxu0
    %v146 = vadd.f32 %v80, %v145
    %v147 = vpop.f32.mrf.mxu0
    %148 = vdwg.mxu0
    %149 = vmatpush.bf16.msra.mxu0 0
    %150 = vmatpush.bf16.msra.mxu0 0
    %151 = vmatpush.bf16.msra.mxu0 0
    %152 = vmatpush.bf16.msra.mxu0 0
    %153 = vmatpush.bf16.msra.mxu0 0
    %154 = vmatpush.bf16.msra.mxu0 0
    %155 = vmatpush.bf16.msra.mxu0 0
    %156 = vmatpush.bf16.msra.mxu0 %v101
    %157 = vmatmul.bf16.gmra.mxu0 %v108
    %v158 = vpop.f32.mrf.mxu0
    %v159 = vadd.f32 %v81, %v158
    %v160 = vpop.f32.mrf.mxu0
    %161 = vdwg.mxu0
    %162 = vst [vmem:[#allocation2] sm:$0xff] %v120
    %163 = vst [vmem:[#allocation2 + $0x8] sm:$0xff] %v133
    %164 = vst [vmem:[#allocation2 + $0x10] sm:$0xff] %v146
    %165 = vst [vmem:[#allocation2 + $0x18] sm:$0xff] %v159
    %v166 = vld [vmem:[#allocation10] sm:$0xff]
    %v167 = vld [vmem:[#allocation10 + $0x8] sm:$0xff]
    %v168 = vld [vmem:[#allocation10 + $0x10] sm:$0xff]
    %v169 = vld [vmem:[#allocation10 + $0x18] sm:$0xff]
    %v170 = vld [vmem:[#allocation10 + $0x20] sm:$0xff]
    %v171 = vld [vmem:[#allocation10 + $0x28] sm:$0xff]
    %v172 = vld [vmem:[#allocation10 + $0x30] sm:$0xff]
    %v173 = vld [vmem:[#allocation10 + $0x38] sm:$0xff]
    %v174 = vld [vmem:[#allocation10 + $0x40] sm:$0xff]
    %v175 = vld [vmem:[#allocation10 + $0x48] sm:$0xff]
    %v176 = vld [vmem:[#allocation10 + $0x50] sm:$0xff]
    %v177 = vld [vmem:[#allocation10 + $0x58] sm:$0xff]
    %v178 = vld [vmem:[#allocation10 + $0x60] sm:$0xff]
    %v179 = vld [vmem:[#allocation10 + $0x68] sm:$0xff]
    %v180 = vld [vmem:[#allocation10 + $0x70] sm:$0xff]
    %v181 = vld [vmem:[#allocation10 + $0x78] sm:$0xff]
    %v182 = vld [vmem:[#allocation10 + $0x80] sm:$0xff]
    %v183 = vld [vmem:[#allocation10 + $0x88] sm:$0xff]
    %v184 = vld [vmem:[#allocation10 + $0x90] sm:$0xff]
    %v185 = vld [vmem:[#allocation10 + $0x98] sm:$0xff]
    %v186 = vld [vmem:[#allocation10 + $0xa0] sm:$0xff]
    %v187 = vld [vmem:[#allocation10 + $0xa8] sm:$0xff]
    %v188 = vld [vmem:[#allocation10 + $0xb0] sm:$0xff]
    %v189 = vld [vmem:[#allocation10 + $0xb8] sm:$0xff]
    %v190 = vld [vmem:[#allocation10 + $0xc0] sm:$0xff]
    %v191 = vld [vmem:[#allocation10 + $0xc8] sm:$0xff]
    %v192 = vld [vmem:[#allocation10 + $0xd0] sm:$0xff]
    %v193 = vld [vmem:[#allocation10 + $0xd8] sm:$0xff]
    %v194 = vld [vmem:[#allocation10 + $0xe0] sm:$0xff]
    %v195 = vld [vmem:[#allocation10 + $0xe8] sm:$0xff]
    %v196 = vld [vmem:[#allocation10 + $0xf0] sm:$0xff]
    %v197 = vld [vmem:[#allocation10 + $0xf8] sm:$0xff]
    %s198 = smul.u32 0, 4
    %s199 = smul.addr %s198, 8
    %s200 = scalar_lea.vmem [#allocation2], %s199
    %v201 = vld [vmem:[%s200] ss:$8 sm:$0xf]
    %v234 = vunpack.c.l.b16 %v166
    %v235 = vunpack.c.h.b16 %v166
    %v236 = vunpack.c.l.b16 %v167
    %v237 = vunpack.c.h.b16 %v167
    %v238 = vunpack.c.l.b16 %v168
    %v239 = vunpack.c.h.b16 %v168
    %v240 = vunpack.c.l.b16 %v169
    %v241 = vunpack.c.h.b16 %v169
    %v242 = vunpack.c.l.b16 %v170
    %v243 = vunpack.c.h.b16 %v170
    %v244 = vunpack.c.l.b16 %v171
    %v245 = vunpack.c.h.b16 %v171
    %v246 = vunpack.c.l.b16 %v172
    %v247 = vunpack.c.h.b16 %v172
    %v248 = vunpack.c.l.b16 %v173
    %v249 = vunpack.c.h.b16 %v173
    %v250 = vunpack.c.l.b16 %v174
    %v251 = vunpack.c.h.b16 %v174
    %v252 = vunpack.c.l.b16 %v175
    %v253 = vunpack.c.h.b16 %v175
    %v254 = vunpack.c.l.b16 %v176
    %v255 = vunpack.c.h.b16 %v176
    %v256 = vunpack.c.l.b16 %v177
    %v257 = vunpack.c.h.b16 %v177
    %v258 = vunpack.c.l.b16 %v178
    %v259 = vunpack.c.h.b16 %v178
    %v260 = vunpack.c.l.b16 %v179
    %v261 = vunpack.c.h.b16 %v179
    %v262 = vunpack.c.l.b16 %v180
    %v263 = vunpack.c.h.b16 %v180
    %v264 = vunpack.c.l.b16 %v181
    %v265 = vunpack.c.h.b16 %v181
    %v266 = vunpack.c.l.b16 %v182
    %v267 = vunpack.c.h.b16 %v182
    %v268 = vunpack.c.l.b16 %v183
    %v269 = vunpack.c.h.b16 %v183
    %v270 = vunpack.c.l.b16 %v184
    %v271 = vunpack.c.h.b16 %v184
    %v272 = vunpack.c.l.b16 %v185
    %v273 = vunpack.c.h.b16 %v185
    %v274 = vunpack.c.l.b16 %v186
    %v275 = vunpack.c.h.b16 %v186
    %v276 = vunpack.c.l.b16 %v187
    %v277 = vunpack.c.h.b16 %v187
    %v278 = vunpack.c.l.b16 %v188
    %v279 = vunpack.c.h.b16 %v188
    %v280 = vunpack.c.l.b16 %v189
    %v281 = vunpack.c.h.b16 %v189
    %v282 = vunpack.c.l.b16 %v190
    %v283 = vunpack.c.h.b16 %v190
    %v284 = vunpack.c.l.b16 %v191
    %v285 = vunpack.c.h.b16 %v191
    %v286 = vunpack.c.l.b16 %v192
    %v287 = vunpack.c.h.b16 %v192
    %v288 = vunpack.c.l.b16 %v193
    %v289 = vunpack.c.h.b16 %v193
    %v290 = vunpack.c.l.b16 %v194
    %v291 = vunpack.c.h.b16 %v194
    %v292 = vunpack.c.l.b16 %v195
    %v293 = vunpack.c.h.b16 %v195
    %v294 = vunpack.c.l.b16 %v196
    %v295 = vunpack.c.h.b16 %v196
    %v296 = vunpack.c.l.b16 %v197
    %v297 = vunpack.c.h.b16 %v197
    %v298 = vpack.c.b16 %v238, %v234
    %v299 = vpack.c.b16 %v239, %v235
    %v300 = vpack.c.b16 %v240, %v236
    %v301 = vpack.c.b16 %v241, %v237
    %v302 = vpack.c.b16 %v246, %v242
    %v303 = vpack.c.b16 %v247, %v243
    %v304 = vpack.c.b16 %v248, %v244
    %v305 = vpack.c.b16 %v249, %v245
    %v306 = vpack.c.b16 %v254, %v250
    %v307 = vpack.c.b16 %v255, %v251
    %v308 = vpack.c.b16 %v256, %v252
    %v309 = vpack.c.b16 %v257, %v253
    %v310 = vpack.c.b16 %v262, %v258
    %v311 = vpack.c.b16 %v263, %v259
    %v312 = vpack.c.b16 %v264, %v260
    %v313 = vpack.c.b16 %v265, %v261
    %v314 = vpack.c.b16 %v270, %v266
    %v315 = vpack.c.b16 %v271, %v267
    %v316 = vpack.c.b16 %v272, %v268
    %v317 = vpack.c.b16 %v273, %v269
    %v318 = vpack.c.b16 %v278, %v274
    %v319 = vpack.c.b16 %v279, %v275
    %v320 = vpack.c.b16 %v280, %v276
    %v321 = vpack.c.b16 %v281, %v277
    %v322 = vpack.c.b16 %v286, %v282
    %v323 = vpack.c.b16 %v287, %v283
    %v324 = vpack.c.b16 %v288, %v284
    %v325 = vpack.c.b16 %v289, %v285
    %v326 = vpack.c.b16 %v294, %v290
    %v327 = vpack.c.b16 %v295, %v291
    %v328 = vpack.c.b16 %v296, %v292
    %v329 = vpack.c.b16 %v297, %v293
    %362 = vmatpush.bf16.msra.mxu0 %v326
    %363 = vmatpush.bf16.msra.mxu0 %v322
    %364 = vmatpush.bf16.msra.mxu0 %v318
    %365 = vmatpush.bf16.msra.mxu0 %v314
    %366 = vmatpush.bf16.msra.mxu0 %v310
    %367 = vmatpush.bf16.msra.mxu0 %v306
    %368 = vmatpush.bf16.msra.mxu0 %v302
    %369 = vmatpush.bf16.msra.mxu0 %v298
    %370 = vmatmul.bf16.gmra.mxu0 0
    %v371 = vpop.f32.mrf.mxu0
    %v372 = vadd.f32 0.0, %v371
    %v373 = vpop.f32.mrf.mxu0
    %374 = vdwg.mxu0
    %375 = vmatpush.bf16.msra.mxu0 %v327
    %376 = vmatpush.bf16.msra.mxu0 %v323
    %377 = vmatpush.bf16.msra.mxu0 %v319
    %378 = vmatpush.bf16.msra.mxu0 %v315
    %379 = vmatpush.bf16.msra.mxu0 %v311
    %380 = vmatpush.bf16.msra.mxu0 %v307
    %381 = vmatpush.bf16.msra.mxu0 %v303
    %382 = vmatpush.bf16.msra.mxu0 %v299
    %383 = vmatmul.bf16.gmra.mxu0 0
    %v384 = vpop.f32.mrf.mxu0
    %v385 = vadd.f32 0.0, %v384
    %v386 = vpop.f32.mrf.mxu0
    %387 = vdwg.mxu0
    %388 = vmatpush.bf16.msra.mxu0 %v328
    %389 = vmatpush.bf16.msra.mxu0 %v324
    %390 = vmatpush.bf16.msra.mxu0 %v320
    %391 = vmatpush.bf16.msra.mxu0 %v316
    %392 = vmatpush.bf16.msra.mxu0 %v312
    %393 = vmatpush.bf16.msra.mxu0 %v308
    %394 = vmatpush.bf16.msra.mxu0 %v304
    %395 = vmatpush.bf16.msra.mxu0 %v300
    %396 = vmatmul.bf16.gmra.mxu0 0
    %v397 = vpop.f32.mrf.mxu0
    %v398 = vadd.f32 0.0, %v397
    %v399 = vpop.f32.mrf.mxu0
    %400 = vdwg.mxu0
    %401 = vmatpush.bf16.msra.mxu0 %v329
    %402 = vmatpush.bf16.msra.mxu0 %v325
    %403 = vmatpush.bf16.msra.mxu0 %v321
    %404 = vmatpush.bf16.msra.mxu0 %v317
    %405 = vmatpush.bf16.msra.mxu0 %v313
    %406 = vmatpush.bf16.msra.mxu0 %v309
    %407 = vmatpush.bf16.msra.mxu0 %v305
    %408 = vmatpush.bf16.msra.mxu0 %v301
    %409 = vmatmul.bf16.gmra.mxu0 0
    %v410 = vpop.f32.mrf.mxu0
    %v411 = vadd.f32 0.0, %v410
    %v412 = vpop.f32.mrf.mxu0
    %413 = vdwg.mxu0
    %v418 = vrot.slane %v385, 7
    %v419 = vrot.slane %v398, 6
    %v420 = vrot.slane %v411, 5
    %vm421 = vcmask 1040384
    %v422 = vsel %vm421, %v372, %v418
    %vm423 = vcmask 1042434
    %v424 = vsel %vm423, %v419, %v420
    %vm425 = vcmask 1041408
    %v426 = vsel %vm425, %v422, %v424
    %v428 = vadd.f32 %v201, %v426
    %v429 = vmul.f32 %v428, 0.5
    %v430 = vtanh.pop %v429
    %v431 = vmul.f32 %v430, 0.5
    %v432 = vadd.f32 %v431, 0.5
    %v434 = vrot.slane %v428, 3
    %v436 = vtanh.pop %v434
    %v438 = vrot.slane %v432, 1
    %v440 = vmul.f32 %v438, 0.0
    %v441 = vmul.f32 %v432, %v436
    %v442 = vadd.f32 %v440, %v441
    %v443 = vtanh.pop %v442
    %v444 = vrot.slane %v432, 2
    %v446 = vmul.f32 %v444, %v443
    %s447 = sadd.s32 0, 1
    %s448 = sshra.s32 %s447, 3
    %s449 = sand.u32 %s447, 7
    %s450 = sshra.s32 %s447, 3
    %s451 = sand.u32 %s447, 7
    %s452 = smul.u32 %s448, 4
    %s453 = smul.u32 %s452, 8
    %s454 = sadd.s32 %s453, %s451
    %s455 = scalar_lea.vmem [#allocation2], %s454
    %v456 = vld [vmem:[%s455] ss:$8 sm:$0xf]
    %v457 = vpack.c.bf16 %v446, %v446
    %458 = vmatpush.bf16.msra.mxu0 %v326
    %459 = vmatpush.bf16.msra.mxu0 %v322
    %460 = vmatpush.bf16.msra.mxu0 %v318
    %461 = vmatpush.bf16.msra.mxu0 %v314
    %462 = vmatpush.bf16.msra.mxu0 %v310
    %463 = vmatpush.bf16.msra.mxu0 %v306
    %464 = vmatpush.bf16.msra.mxu0 %v302
    %465 = vmatpush.bf16.msra.mxu0 %v298
    %466 = vmatmul.bf16.gmra.mxu0 %v457
    %v467 = vpop.f32.mrf.mxu0
    %v468 = vadd.f32 0.0, %v467
    %v469 = vpop.f32.mrf.mxu0
    %470 = vdwg.mxu0
    %471 = vmatpush.bf16.msra.mxu0 %v327
    %472 = vmatpush.bf16.msra.mxu0 %v323
    %473 = vmatpush.bf16.msra.mxu0 %v319
    %474 = vmatpush.bf16.msra.mxu0 %v315
    %475 = vmatpush.bf16.msra.mxu0 %v311
    %476 = vmatpush.bf16.msra.mxu0 %v307
    %477 = vmatpush.bf16.msra.mxu0 %v303
    %478 = vmatpush.bf16.msra.mxu0 %v299
    %479 = vmatmul.bf16.gmra.mxu0 %v457
    %v480 = vpop.f32.mrf.mxu0
    %v481 = vadd.f32 0.0, %v480
    %v482 = vpop.f32.mrf.mxu0
    %483 = vdwg.mxu0
    %484 = vmatpush.bf16.msra.mxu0 %v328
    %485 = vmatpush.bf16.msra.mxu0 %v324
    %486 = vmatpush.bf16.msra.mxu0 %v320
    %487 = vmatpush.bf16.msra.mxu0 %v316
    %488 = vmatpush.bf16.msra.mxu0 %v312
    %489 = vmatpush.bf16.msra.mxu0 %v308
    %490 = vmatpush.bf16.msra.mxu0 %v304
    %491 = vmatpush.bf16.msra.mxu0 %v300
    %492 = vmatmul.bf16.gmra.mxu0 %v457
    %v493 = vpop.f32.mrf.mxu0
    %v494 = vadd.f32 0.0, %v493
    %v495 = vpop.f32.mrf.mxu0
    %496 = vdwg.mxu0
    %497 = vmatpush.bf16.msra.mxu0 %v329
    %498 = vmatpush.bf16.msra.mxu0 %v325
    %499 = vmatpush.bf16.msra.mxu0 %v321
    %500 = vmatpush.bf16.msra.mxu0 %v317
    %501 = vmatpush.bf16.msra.mxu0 %v313
    %502 = vmatpush.bf16.msra.mxu0 %v309
    %503 = vmatpush.bf16.msra.mxu0 %v305
    %504 = vmatpush.bf16.msra.mxu0 %v301
    %505 = vmatmul.bf16.gmra.mxu0 %v457
    %v506 = vpop.f32.mrf.mxu0
    %v507 = vadd.f32 0.0, %v506
    %v508 = vpop.f32.mrf.mxu0
    %509 = vdwg.mxu0
    %v514 = vrot.slane %v481, 7
    %v515 = vrot.slane %v494, 6
    %v516 = vrot.slane %v507, 5
    %v517 = vsel %vm421, %v468, %v514
    %v518 = vsel %vm423, %v515, %v516
    %v519 = vsel %vm425, %v517, %v518
    %v521 = vadd.f32 %v456, %v519
    %v522 = vmul.f32 %v521, 0.5
    %v523 = vtanh.pop %v522
    %v524 = vmul.f32 %v523, 0.5
    %v525 = vadd.f32 %v524, 0.5
    %v527 = vrot.slane %v521, 3
    %v529 = vtanh.pop %v527
    %v531 = vrot.slane %v525, 1
    %v533 = vmul.f32 %v531, %v442
    %v534 = vmul.f32 %v525, %v529
    %v535 = vadd.f32 %v533, %v534
    %v536 = vtanh.pop %v535
    %v537 = vrot.slane %v525, 2
    %v539 = vmul.f32 %v537, %v536
    %s540 = sadd.s32 0, 2
    %s541 = sshra.s32 %s540, 3
    %s542 = sand.u32 %s540, 7
    %s543 = sshra.s32 %s540, 3
    %s544 = sand.u32 %s540, 7
    %s545 = smul.u32 %s541, 4
    %s546 = smul.u32 %s545, 8
    %s547 = sadd.s32 %s546, %s544
    %s548 = scalar_lea.vmem [#allocation2], %s547
    %v549 = vld [vmem:[%s548] ss:$8 sm:$0xf]
    %v550 = vpack.c.bf16 %v539, %v539
    %551 = vmatpush.bf16.msra.mxu0 %v326
    %552 = vmatpush.bf16.msra.mxu0 %v322
    %553 = vmatpush.bf16.msra.mxu0 %v318
    %554 = vmatpush.bf16.msra.mxu0 %v314
    %555 = vmatpush.bf16.msra.mxu0 %v310
    %556 = vmatpush.bf16.msra.mxu0 %v306
    %557 = vmatpush.bf16.msra.mxu0 %v302
    %558 = vmatpush.bf16.msra.mxu0 %v298
    %559 = vmatmul.bf16.gmra.mxu0 %v550
    %v560 = vpop.f32.mrf.mxu0
    %v561 = vadd.f32 0.0, %v560
    %v562 = vpop.f32.mrf.mxu0
    %563 = vdwg.mxu0
    %564 = vmatpush.bf16.msra.mxu0 %v327
    %565 = vmatpush.bf16.msra.mxu0 %v323
    %566 = vmatpush.bf16.msra.mxu0 %v319
    %567 = vmatpush.bf16.msra.mxu0 %v315
    %568 = vmatpush.bf16.msra.mxu0 %v311
    %569 = vmatpush.bf16.msra.mxu0 %v307
    %570 = vmatpush.bf16.msra.mxu0 %v303
    %571 = vmatpush.bf16.msra.mxu0 %v299
    %572 = vmatmul.bf16.gmra.mxu0 %v550
    %v573 = vpop.f32.mrf.mxu0
    %v574 = vadd.f32 0.0, %v573
    %v575 = vpop.f32.mrf.mxu0
    %576 = vdwg.mxu0
    %577 = vmatpush.bf16.msra.mxu0 %v328
    %578 = vmatpush.bf16.msra.mxu0 %v324
    %579 = vmatpush.bf16.msra.mxu0 %v320
    %580 = vmatpush.bf16.msra.mxu0 %v316
    %581 = vmatpush.bf16.msra.mxu0 %v312
    %582 = vmatpush.bf16.msra.mxu0 %v308
    %583 = vmatpush.bf16.msra.mxu0 %v304
    %584 = vmatpush.bf16.msra.mxu0 %v300
    %585 = vmatmul.bf16.gmra.mxu0 %v550
    %v586 = vpop.f32.mrf.mxu0
    %v587 = vadd.f32 0.0, %v586
    %v588 = vpop.f32.mrf.mxu0
    %589 = vdwg.mxu0
    %590 = vmatpush.bf16.msra.mxu0 %v329
    %591 = vmatpush.bf16.msra.mxu0 %v325
    %592 = vmatpush.bf16.msra.mxu0 %v321
    %593 = vmatpush.bf16.msra.mxu0 %v317
    %594 = vmatpush.bf16.msra.mxu0 %v313
    %595 = vmatpush.bf16.msra.mxu0 %v309
    %596 = vmatpush.bf16.msra.mxu0 %v305
    %597 = vmatpush.bf16.msra.mxu0 %v301
    %598 = vmatmul.bf16.gmra.mxu0 %v550
    %v599 = vpop.f32.mrf.mxu0
    %v600 = vadd.f32 0.0, %v599
    %v601 = vpop.f32.mrf.mxu0
    %602 = vdwg.mxu0
    %v607 = vrot.slane %v574, 7
    %v608 = vrot.slane %v587, 6
    %v609 = vrot.slane %v600, 5
    %v610 = vsel %vm421, %v561, %v607
    %v611 = vsel %vm423, %v608, %v609
    %v612 = vsel %vm425, %v610, %v611
    %v614 = vadd.f32 %v549, %v612
    %v615 = vmul.f32 %v614, 0.5
    %v616 = vtanh.pop %v615
    %v617 = vmul.f32 %v616, 0.5
    %v618 = vadd.f32 %v617, 0.5
    %v620 = vrot.slane %v614, 3
    %v622 = vtanh.pop %v620
    %v624 = vrot.slane %v618, 1
    %v626 = vmul.f32 %v624, %v535
    %v627 = vmul.f32 %v618, %v622
    %v628 = vadd.f32 %v626, %v627
    %v629 = vtanh.pop %v628
    %v630 = vrot.slane %v618, 2
    %v632 = vmul.f32 %v630, %v629
    %s633 = sadd.s32 0, 3
    %s634 = sshra.s32 %s633, 3
    %s635 = sand.u32 %s633, 7
    %s636 = sshra.s32 %s633, 3
    %s637 = sand.u32 %s633, 7
    %s638 = smul.u32 %s634, 4
    %s639 = smul.u32 %s638, 8
    %s640 = sadd.s32 %s639, %s637
    %s641 = scalar_lea.vmem [#allocation2], %s640
    %v642 = vld [vmem:[%s641] ss:$8 sm:$0xf]
    %v643 = vpack.c.bf16 %v632, %v632
    %644 = vmatpush.bf16.msra.mxu0 %v326
    %645 = vmatpush.bf16.msra.mxu0 %v322
    %646 = vmatpush.bf16.msra.mxu0 %v318
    %647 = vmatpush.bf16.msra.mxu0 %v314
    %648 = vmatpush.bf16.msra.mxu0 %v310
    %649 = vmatpush.bf16.msra.mxu0 %v306
    %650 = vmatpush.bf16.msra.mxu0 %v302
    %651 = vmatpush.bf16.msra.mxu0 %v298
    %652 = vmatmul.bf16.gmra.mxu0 %v643
    %v653 = vpop.f32.mrf.mxu0
    %v654 = vadd.f32 0.0, %v653
    %v655 = vpop.f32.mrf.mxu0
    %656 = vdwg.mxu0
    %657 = vmatpush.bf16.msra.mxu0 %v327
    %658 = vmatpush.bf16.msra.mxu0 %v323
    %659 = vmatpush.bf16.msra.mxu0 %v319
    %660 = vmatpush.bf16.msra.mxu0 %v315
    %661 = vmatpush.bf16.msra.mxu0 %v311
    %662 = vmatpush.bf16.msra.mxu0 %v307
    %663 = vmatpush.bf16.msra.mxu0 %v303
    %664 = vmatpush.bf16.msra.mxu0 %v299
    %665 = vmatmul.bf16.gmra.mxu0 %v643
    %v666 = vpop.f32.mrf.mxu0
    %v667 = vadd.f32 0.0, %v666
    %v668 = vpop.f32.mrf.mxu0
    %669 = vdwg.mxu0
    %670 = vmatpush.bf16.msra.mxu0 %v328
    %671 = vmatpush.bf16.msra.mxu0 %v324
    %672 = vmatpush.bf16.msra.mxu0 %v320
    %673 = vmatpush.bf16.msra.mxu0 %v316
    %674 = vmatpush.bf16.msra.mxu0 %v312
    %675 = vmatpush.bf16.msra.mxu0 %v308
    %676 = vmatpush.bf16.msra.mxu0 %v304
    %677 = vmatpush.bf16.msra.mxu0 %v300
    %678 = vmatmul.bf16.gmra.mxu0 %v643
    %v679 = vpop.f32.mrf.mxu0
    %v680 = vadd.f32 0.0, %v679
    %v681 = vpop.f32.mrf.mxu0
    %682 = vdwg.mxu0
    %683 = vmatpush.bf16.msra.mxu0 %v329
    %684 = vmatpush.bf16.msra.mxu0 %v325
    %685 = vmatpush.bf16.msra.mxu0 %v321
    %686 = vmatpush.bf16.msra.mxu0 %v317
    %687 = vmatpush.bf16.msra.mxu0 %v313
    %688 = vmatpush.bf16.msra.mxu0 %v309
    %689 = vmatpush.bf16.msra.mxu0 %v305
    %690 = vmatpush.bf16.msra.mxu0 %v301
    %691 = vmatmul.bf16.gmra.mxu0 %v643
    %v692 = vpop.f32.mrf.mxu0
    %v693 = vadd.f32 0.0, %v692
    %v694 = vpop.f32.mrf.mxu0
    %695 = vdwg.mxu0
    %v700 = vrot.slane %v667, 7
    %v701 = vrot.slane %v680, 6
    %v702 = vrot.slane %v693, 5
    %v703 = vsel %vm421, %v654, %v700
    %v704 = vsel %vm423, %v701, %v702
    %v705 = vsel %vm425, %v703, %v704
    %v707 = vadd.f32 %v642, %v705
    %v708 = vmul.f32 %v707, 0.5
    %v709 = vtanh.pop %v708
    %v710 = vmul.f32 %v709, 0.5
    %v711 = vadd.f32 %v710, 0.5
    %v713 = vrot.slane %v707, 3
    %v715 = vtanh.pop %v713
    %v717 = vrot.slane %v711, 1
    %v719 = vmul.f32 %v717, %v628
    %v720 = vmul.f32 %v711, %v715
    %v721 = vadd.f32 %v719, %v720
    %v722 = vtanh.pop %v721
    %v723 = vrot.slane %v711, 2
    %v725 = vmul.f32 %v723, %v722
    %s726 = sadd.s32 0, 4
    %s727 = sshra.s32 %s726, 3
    %s728 = sand.u32 %s726, 7
    %s729 = sshra.s32 %s726, 3
    %s730 = sand.u32 %s726, 7
    %s731 = smul.u32 %s727, 4
    %s732 = smul.u32 %s731, 8
    %s733 = sadd.s32 %s732, %s730
    %s734 = scalar_lea.vmem [#allocation2], %s733
    %v735 = vld [vmem:[%s734] ss:$8 sm:$0xf]
    %v736 = vpack.c.bf16 %v725, %v725
    %737 = vmatpush.bf16.msra.mxu0 %v326
    %738 = vmatpush.bf16.msra.mxu0 %v322
    %739 = vmatpush.bf16.msra.mxu0 %v318
    %740 = vmatpush.bf16.msra.mxu0 %v314
    %741 = vmatpush.bf16.msra.mxu0 %v310
    %742 = vmatpush.bf16.msra.mxu0 %v306
    %743 = vmatpush.bf16.msra.mxu0 %v302
    %744 = vmatpush.bf16.msra.mxu0 %v298
    %745 = vmatmul.bf16.gmra.mxu0 %v736
    %v746 = vpop.f32.mrf.mxu0
    %v747 = vadd.f32 0.0, %v746
    %v748 = vpop.f32.mrf.mxu0
    %749 = vdwg.mxu0
    %750 = vmatpush.bf16.msra.mxu0 %v327
    %751 = vmatpush.bf16.msra.mxu0 %v323
    %752 = vmatpush.bf16.msra.mxu0 %v319
    %753 = vmatpush.bf16.msra.mxu0 %v315
    %754 = vmatpush.bf16.msra.mxu0 %v311
    %755 = vmatpush.bf16.msra.mxu0 %v307
    %756 = vmatpush.bf16.msra.mxu0 %v303
    %757 = vmatpush.bf16.msra.mxu0 %v299
    %758 = vmatmul.bf16.gmra.mxu0 %v736
    %v759 = vpop.f32.mrf.mxu0
    %v760 = vadd.f32 0.0, %v759
    %v761 = vpop.f32.mrf.mxu0
    %762 = vdwg.mxu0
    %763 = vmatpush.bf16.msra.mxu0 %v328
    %764 = vmatpush.bf16.msra.mxu0 %v324
    %765 = vmatpush.bf16.msra.mxu0 %v320
    %766 = vmatpush.bf16.msra.mxu0 %v316
    %767 = vmatpush.bf16.msra.mxu0 %v312
    %768 = vmatpush.bf16.msra.mxu0 %v308
    %769 = vmatpush.bf16.msra.mxu0 %v304
    %770 = vmatpush.bf16.msra.mxu0 %v300
    %771 = vmatmul.bf16.gmra.mxu0 %v736
    %v772 = vpop.f32.mrf.mxu0
    %v773 = vadd.f32 0.0, %v772
    %v774 = vpop.f32.mrf.mxu0
    %775 = vdwg.mxu0
    %776 = vmatpush.bf16.msra.mxu0 %v329
    %777 = vmatpush.bf16.msra.mxu0 %v325
    %778 = vmatpush.bf16.msra.mxu0 %v321
    %779 = vmatpush.bf16.msra.mxu0 %v317
    %780 = vmatpush.bf16.msra.mxu0 %v313
    %781 = vmatpush.bf16.msra.mxu0 %v309
    %782 = vmatpush.bf16.msra.mxu0 %v305
    %783 = vmatpush.bf16.msra.mxu0 %v301
    %784 = vmatmul.bf16.gmra.mxu0 %v736
    %v785 = vpop.f32.mrf.mxu0
    %v786 = vadd.f32 0.0, %v785
    %v787 = vpop.f32.mrf.mxu0
    %788 = vdwg.mxu0
    %v793 = vrot.slane %v760, 7
    %v794 = vrot.slane %v773, 6
    %v795 = vrot.slane %v786, 5
    %v796 = vsel %vm421, %v747, %v793
    %v797 = vsel %vm423, %v794, %v795
    %v798 = vsel %vm425, %v796, %v797
    %v800 = vadd.f32 %v735, %v798
    %v801 = vmul.f32 %v800, 0.5
    %v802 = vtanh.pop %v801
    %v803 = vmul.f32 %v802, 0.5
    %v804 = vadd.f32 %v803, 0.5
    %v806 = vrot.slane %v800, 3
    %v808 = vtanh.pop %v806
    %v810 = vrot.slane %v804, 1
    %v812 = vmul.f32 %v810, %v721
    %v813 = vmul.f32 %v804, %v808
    %v814 = vadd.f32 %v812, %v813
    %v815 = vtanh.pop %v814
    %v816 = vrot.slane %v804, 2
    %v818 = vmul.f32 %v816, %v815
    %s819 = sadd.s32 0, 5
    %s820 = sshra.s32 %s819, 3
    %s821 = sand.u32 %s819, 7
    %s822 = sshra.s32 %s819, 3
    %s823 = sand.u32 %s819, 7
    %s824 = smul.u32 %s820, 4
    %s825 = smul.u32 %s824, 8
    %s826 = sadd.s32 %s825, %s823
    %s827 = scalar_lea.vmem [#allocation2], %s826
    %v828 = vld [vmem:[%s827] ss:$8 sm:$0xf]
    %v829 = vpack.c.bf16 %v818, %v818
    %830 = vmatpush.bf16.msra.mxu0 %v326
    %831 = vmatpush.bf16.msra.mxu0 %v322
    %832 = vmatpush.bf16.msra.mxu0 %v318
    %833 = vmatpush.bf16.msra.mxu0 %v314
    %834 = vmatpush.bf16.msra.mxu0 %v310
    %835 = vmatpush.bf16.msra.mxu0 %v306
    %836 = vmatpush.bf16.msra.mxu0 %v302
    %837 = vmatpush.bf16.msra.mxu0 %v298
    %838 = vmatmul.bf16.gmra.mxu0 %v829
    %v839 = vpop.f32.mrf.mxu0
    %v840 = vadd.f32 0.0, %v839
    %v841 = vpop.f32.mrf.mxu0
    %842 = vdwg.mxu0
    %843 = vmatpush.bf16.msra.mxu0 %v327
    %844 = vmatpush.bf16.msra.mxu0 %v323
    %845 = vmatpush.bf16.msra.mxu0 %v319
    %846 = vmatpush.bf16.msra.mxu0 %v315
    %847 = vmatpush.bf16.msra.mxu0 %v311
    %848 = vmatpush.bf16.msra.mxu0 %v307
    %849 = vmatpush.bf16.msra.mxu0 %v303
    %850 = vmatpush.bf16.msra.mxu0 %v299
    %851 = vmatmul.bf16.gmra.mxu0 %v829
    %v852 = vpop.f32.mrf.mxu0
    %v853 = vadd.f32 0.0, %v852
    %v854 = vpop.f32.mrf.mxu0
    %855 = vdwg.mxu0
    %856 = vmatpush.bf16.msra.mxu0 %v328
    %857 = vmatpush.bf16.msra.mxu0 %v324
    %858 = vmatpush.bf16.msra.mxu0 %v320
    %859 = vmatpush.bf16.msra.mxu0 %v316
    %860 = vmatpush.bf16.msra.mxu0 %v312
    %861 = vmatpush.bf16.msra.mxu0 %v308
    %862 = vmatpush.bf16.msra.mxu0 %v304
    %863 = vmatpush.bf16.msra.mxu0 %v300
    %864 = vmatmul.bf16.gmra.mxu0 %v829
    %v865 = vpop.f32.mrf.mxu0
    %v866 = vadd.f32 0.0, %v865
    %v867 = vpop.f32.mrf.mxu0
    %868 = vdwg.mxu0
    %869 = vmatpush.bf16.msra.mxu0 %v329
    %870 = vmatpush.bf16.msra.mxu0 %v325
    %871 = vmatpush.bf16.msra.mxu0 %v321
    %872 = vmatpush.bf16.msra.mxu0 %v317
    %873 = vmatpush.bf16.msra.mxu0 %v313
    %874 = vmatpush.bf16.msra.mxu0 %v309
    %875 = vmatpush.bf16.msra.mxu0 %v305
    %876 = vmatpush.bf16.msra.mxu0 %v301
    %877 = vmatmul.bf16.gmra.mxu0 %v829
    %v878 = vpop.f32.mrf.mxu0
    %v879 = vadd.f32 0.0, %v878
    %v880 = vpop.f32.mrf.mxu0
    %881 = vdwg.mxu0
    %v886 = vrot.slane %v853, 7
    %v887 = vrot.slane %v866, 6
    %v888 = vrot.slane %v879, 5
    %v889 = vsel %vm421, %v840, %v886
    %v890 = vsel %vm423, %v887, %v888
    %v891 = vsel %vm425, %v889, %v890
    %v893 = vadd.f32 %v828, %v891
    %v894 = vmul.f32 %v893, 0.5
    %v895 = vtanh.pop %v894
    %v896 = vmul.f32 %v895, 0.5
    %v897 = vadd.f32 %v896, 0.5
    %v899 = vrot.slane %v893, 3
    %v901 = vtanh.pop %v899
    %v903 = vrot.slane %v897, 1
    %v905 = vmul.f32 %v903, %v814
    %v906 = vmul.f32 %v897, %v901
    %v907 = vadd.f32 %v905, %v906
    %v908 = vtanh.pop %v907
    %v909 = vrot.slane %v897, 2
    %v911 = vmul.f32 %v909, %v908
    %s912 = sadd.s32 0, 6
    %s913 = sshra.s32 %s912, 3
    %s914 = sand.u32 %s912, 7
    %s915 = sshra.s32 %s912, 3
    %s916 = sand.u32 %s912, 7
    %s917 = smul.u32 %s913, 4
    %s918 = smul.u32 %s917, 8
    %s919 = sadd.s32 %s918, %s916
    %s920 = scalar_lea.vmem [#allocation2], %s919
    %v921 = vld [vmem:[%s920] ss:$8 sm:$0xf]
    %v922 = vpack.c.bf16 %v911, %v911
    %923 = vmatpush.bf16.msra.mxu0 %v326
    %924 = vmatpush.bf16.msra.mxu0 %v322
    %925 = vmatpush.bf16.msra.mxu0 %v318
    %926 = vmatpush.bf16.msra.mxu0 %v314
    %927 = vmatpush.bf16.msra.mxu0 %v310
    %928 = vmatpush.bf16.msra.mxu0 %v306
    %929 = vmatpush.bf16.msra.mxu0 %v302
    %930 = vmatpush.bf16.msra.mxu0 %v298
    %931 = vmatmul.bf16.gmra.mxu0 %v922
    %v932 = vpop.f32.mrf.mxu0
    %v933 = vadd.f32 0.0, %v932
    %v934 = vpop.f32.mrf.mxu0
    %935 = vdwg.mxu0
    %936 = vmatpush.bf16.msra.mxu0 %v327
    %937 = vmatpush.bf16.msra.mxu0 %v323
    %938 = vmatpush.bf16.msra.mxu0 %v319
    %939 = vmatpush.bf16.msra.mxu0 %v315
    %940 = vmatpush.bf16.msra.mxu0 %v311
    %941 = vmatpush.bf16.msra.mxu0 %v307
    %942 = vmatpush.bf16.msra.mxu0 %v303
    %943 = vmatpush.bf16.msra.mxu0 %v299
    %944 = vmatmul.bf16.gmra.mxu0 %v922
    %v945 = vpop.f32.mrf.mxu0
    %v946 = vadd.f32 0.0, %v945
    %v947 = vpop.f32.mrf.mxu0
    %948 = vdwg.mxu0
    %949 = vmatpush.bf16.msra.mxu0 %v328
    %950 = vmatpush.bf16.msra.mxu0 %v324
    %951 = vmatpush.bf16.msra.mxu0 %v320
    %952 = vmatpush.bf16.msra.mxu0 %v316
    %953 = vmatpush.bf16.msra.mxu0 %v312
    %954 = vmatpush.bf16.msra.mxu0 %v308
    %955 = vmatpush.bf16.msra.mxu0 %v304
    %956 = vmatpush.bf16.msra.mxu0 %v300
    %957 = vmatmul.bf16.gmra.mxu0 %v922
    %v958 = vpop.f32.mrf.mxu0
    %v959 = vadd.f32 0.0, %v958
    %v960 = vpop.f32.mrf.mxu0
    %961 = vdwg.mxu0
    %962 = vmatpush.bf16.msra.mxu0 %v329
    %963 = vmatpush.bf16.msra.mxu0 %v325
    %964 = vmatpush.bf16.msra.mxu0 %v321
    %965 = vmatpush.bf16.msra.mxu0 %v317
    %966 = vmatpush.bf16.msra.mxu0 %v313
    %967 = vmatpush.bf16.msra.mxu0 %v309
    %968 = vmatpush.bf16.msra.mxu0 %v305
    %969 = vmatpush.bf16.msra.mxu0 %v301
    %970 = vmatmul.bf16.gmra.mxu0 %v922
    %v971 = vpop.f32.mrf.mxu0
    %v972 = vadd.f32 0.0, %v971
    %v973 = vpop.f32.mrf.mxu0
    %974 = vdwg.mxu0
    %v979 = vrot.slane %v946, 7
    %v980 = vrot.slane %v959, 6
    %v981 = vrot.slane %v972, 5
    %v982 = vsel %vm421, %v933, %v979
    %v983 = vsel %vm423, %v980, %v981
    %v984 = vsel %vm425, %v982, %v983
    %v986 = vadd.f32 %v921, %v984
    %v987 = vmul.f32 %v986, 0.5
    %v988 = vtanh.pop %v987
    %v989 = vmul.f32 %v988, 0.5
    %v990 = vadd.f32 %v989, 0.5
    %v992 = vrot.slane %v986, 3
    %v994 = vtanh.pop %v992
    %v996 = vrot.slane %v990, 1
    %v998 = vmul.f32 %v996, %v907
    %v999 = vmul.f32 %v990, %v994
    %v1000 = vadd.f32 %v998, %v999
    %v1001 = vtanh.pop %v1000
    %v1002 = vrot.slane %v990, 2
    %v1004 = vmul.f32 %v1002, %v1001
    %s1005 = sadd.s32 0, 7
    %s1006 = sshra.s32 %s1005, 3
    %s1007 = sand.u32 %s1005, 7
    %s1008 = sshra.s32 %s1005, 3
    %s1009 = sand.u32 %s1005, 7
    %s1010 = smul.u32 %s1006, 4
    %s1011 = smul.u32 %s1010, 8
    %s1012 = sadd.s32 %s1011, %s1009
    %s1013 = scalar_lea.vmem [#allocation2], %s1012
    %v1014 = vld [vmem:[%s1013] ss:$8 sm:$0xf]
    %v1015 = vpack.c.bf16 %v1004, %v1004
    %1016 = vmatpush.bf16.msra.mxu0 %v326
    %1017 = vmatpush.bf16.msra.mxu0 %v322
    %1018 = vmatpush.bf16.msra.mxu0 %v318
    %1019 = vmatpush.bf16.msra.mxu0 %v314
    %1020 = vmatpush.bf16.msra.mxu0 %v310
    %1021 = vmatpush.bf16.msra.mxu0 %v306
    %1022 = vmatpush.bf16.msra.mxu0 %v302
    %1023 = vmatpush.bf16.msra.mxu0 %v298
    %1024 = vmatmul.bf16.gmra.mxu0 %v1015
    %v1025 = vpop.f32.mrf.mxu0
    %v1026 = vadd.f32 0.0, %v1025
    %v1027 = vpop.f32.mrf.mxu0
    %1028 = vdwg.mxu0
    %1029 = vmatpush.bf16.msra.mxu0 %v327
    %1030 = vmatpush.bf16.msra.mxu0 %v323
    %1031 = vmatpush.bf16.msra.mxu0 %v319
    %1032 = vmatpush.bf16.msra.mxu0 %v315
    %1033 = vmatpush.bf16.msra.mxu0 %v311
    %1034 = vmatpush.bf16.msra.mxu0 %v307
    %1035 = vmatpush.bf16.msra.mxu0 %v303
    %1036 = vmatpush.bf16.msra.mxu0 %v299
    %1037 = vmatmul.bf16.gmra.mxu0 %v1015
    %v1038 = vpop.f32.mrf.mxu0
    %v1039 = vadd.f32 0.0, %v1038
    %v1040 = vpop.f32.mrf.mxu0
    %1041 = vdwg.mxu0
    %1042 = vmatpush.bf16.msra.mxu0 %v328
    %1043 = vmatpush.bf16.msra.mxu0 %v324
    %1044 = vmatpush.bf16.msra.mxu0 %v320
    %1045 = vmatpush.bf16.msra.mxu0 %v316
    %1046 = vmatpush.bf16.msra.mxu0 %v312
    %1047 = vmatpush.bf16.msra.mxu0 %v308
    %1048 = vmatpush.bf16.msra.mxu0 %v304
    %1049 = vmatpush.bf16.msra.mxu0 %v300
    %1050 = vmatmul.bf16.gmra.mxu0 %v1015
    %v1051 = vpop.f32.mrf.mxu0
    %v1052 = vadd.f32 0.0, %v1051
    %v1053 = vpop.f32.mrf.mxu0
    %1054 = vdwg.mxu0
    %1055 = vmatpush.bf16.msra.mxu0 %v329
    %1056 = vmatpush.bf16.msra.mxu0 %v325
    %1057 = vmatpush.bf16.msra.mxu0 %v321
    %1058 = vmatpush.bf16.msra.mxu0 %v317
    %1059 = vmatpush.bf16.msra.mxu0 %v313
    %1060 = vmatpush.bf16.msra.mxu0 %v309
    %1061 = vmatpush.bf16.msra.mxu0 %v305
    %1062 = vmatpush.bf16.msra.mxu0 %v301
    %1063 = vmatmul.bf16.gmra.mxu0 %v1015
    %v1064 = vpop.f32.mrf.mxu0
    %v1065 = vadd.f32 0.0, %v1064
    %v1066 = vpop.f32.mrf.mxu0
    %1067 = vdwg.mxu0
    %v1072 = vrot.slane %v1039, 7
    %v1073 = vrot.slane %v1052, 6
    %v1074 = vrot.slane %v1065, 5
    %v1075 = vsel %vm421, %v1026, %v1072
    %v1076 = vsel %vm423, %v1073, %v1074
    %v1077 = vsel %vm425, %v1075, %v1076
    %v1079 = vadd.f32 %v1014, %v1077
    %v1080 = vmul.f32 %v1079, 0.5
    %v1081 = vtanh.pop %v1080
    %v1082 = vmul.f32 %v1081, 0.5
    %v1083 = vadd.f32 %v1082, 0.5
    %v1085 = vrot.slane %v1079, 3
    %v1087 = vtanh.pop %v1085
    %v1089 = vrot.slane %v1083, 1
    %v1091 = vmul.f32 %v1089, %v1000
    %v1092 = vmul.f32 %v1083, %v1087
    %v1093 = vadd.f32 %v1091, %v1092
    %v1094 = vtanh.pop %v1093
    %v1095 = vrot.slane %v1083, 2
    %v1097 = vmul.f32 %v1095, %v1094
    %v1099 = vperm.slane %v539, 0
    %v1102 = vperm.slane %v632, 0
    %v1105 = vperm.slane %v725, 0
    %v1108 = vperm.slane %v818, 0
    %v1111 = vperm.slane %v911, 0
    %v1114 = vperm.slane %v1004, 0
    %v1117 = vperm.slane %v1097, 0
    %v1119 = vsel %vm421, %v446, %v1099
    %v1120 = vsel %vm425, %v1119, %v1102
    %vm1121 = vcmask 1042432
    %v1122 = vsel %vm1121, %v1120, %v1105
    %vm1123 = vcmask 1043456
    %v1124 = vsel %vm1123, %v1122, %v1108
    %vm1125 = vcmask 1044480
    %v1126 = vsel %vm1125, %v1124, %v1111
    %vm1127 = vcmask 1045504
    %v1128 = vsel %vm1127, %v1126, %v1114
    %vm1129 = vcmask 1046528
    %v1130 = vsel %vm1129, %v1128, %v1117
    %1131 = vst [vmem:[#allocation3] sm:$0xff] %v1130
    %v1132 = vld [vmem:[%s4] sm:$0x1]
    %v1133 = vld [vmem:[#allocation3] sm:$0xff]
    %s1134 = sld [smem:[#allocation4]]
    %v1135 = vstv %s1134
    %1136 = vmatpush.xpose.msra.mxu0 0.0
    %1137 = vmatpush.xpose.msra.mxu0 0.0
    %1138 = vmatpush.xpose.msra.mxu0 0.0
    %1139 = vmatpush.xpose.msra.mxu0 0.0
    %1140 = vmatpush.xpose.msra.mxu0 0.0
    %1141 = vmatpush.xpose.msra.mxu0 0.0
    %1142 = vmatpush.xpose.msra.mxu0 0.0
    %1143 = vmatpush.xpose.msra.mxu0 0.0
    %1144 = vmatpush.xpose.msra.mxu0 0.0
    %1145 = vmatpush.xpose.msra.mxu0 0.0
    %1146 = vmatpush.xpose.msra.mxu0 0.0
    %1147 = vmatpush.xpose.msra.mxu0 0.0
    %1148 = vmatpush.xpose.msra.mxu0 0.0
    %1149 = vmatpush.xpose.msra.mxu0 0.0
    %1150 = vmatpush.xpose.msra.mxu0 0.0
    %1151 = vmatpush.xpose.msra.mxu0 %v1133
    %1152 = vmatmul.f32.gmra.mxu0 %v1132
    %v1153 = vpop.f32.mrf.mxu0
    %v1154 = vadd.f32 %v1135, %v1153
    %1155 = vdwg.mxu0
    %vm1156 = vcmask 57344
    %1157 = vst.msk [vmem:[#allocation11] sm:$0x1] %vm1156, %v1154
    // Predicated region
    $region38: #{tpu_custom_call.1} parent=1 // pred_check
      _
    $region39: #{tpu_custom_call.1} parent=1 // pred_check_branch
      %1159 = sbr.rel (0) target = $region41
    $region40: #{tpu_custom_call.1} parent=1 // pred_region
      %1161 = vsyncadd [#allocation7], 0
      %s1163 = sshll.u32 [#allocation11], 4
      %s1164 = int_to_ptr.vmem [resolvable:$true] %s1163
      %s1165 = sshll.u32 %s6, 4
      %s1166 = int_to_ptr.hbm [resolvable:$true] %s1165
      %1168 = dma.vmem_to_hbm [thread:$0]  %s1164, 16, %s1166, [#allocation7]
    $region41: #{tpu_custom_call.1} parent=1 // pred_fallthru
      _
    // Predicated region
    $region42: #{tpu_custom_call.1} parent=1 // pred_check
      _
    $region43: #{tpu_custom_call.1} parent=1 // pred_check_branch
      %1170 = sbr.rel (0) target = $region45
    $region44: #{tpu_custom_call.1} parent=1 // pred_region
      %1172 = dma.done [#allocation7], 16
    $region45: #{tpu_custom_call.1} parent=1 // pred_fallthru
      _
    %1173 = vsyncpa [#allocation6], 1
    %1174 = vsyncpa [#allocation9], 1
    %1175 = vsyncpa [#allocation7], 1

</llo_original>
